<compile_context>
chip_gen: v5e
topology: v5e:2x2
jax: 0.10.0
libtpu: 0.0.40
codegen_flags: <defaults>
</compile_context>

<pallas_src>
import jax
import jax.numpy as jnp
from jax.experimental import pallas as pl
from jax.experimental.pallas import tpu as pltpu


def token_mixing_kernel(x_ref, wt_ref, b_ref, o_ref):
    # x_ref  : (tm, D)   tile of flattened tokens (f32 or bf16)
    # wt_ref : (D, Dp)   pre-transposed effective weight (in_features, out_features)
    # b_ref  : (1, Dp)   bias, lane-padded, f32
    # o_ref  : (tm, Dp)  output tile (x's original dtype)
    y = jax.lax.dot_general(
        x_ref[...], wt_ref[...], (((1,), (0,)), ((), ())),
        preferred_element_type=jnp.float32,
    )
    o_ref[...] = (y + b_ref[...]).astype(o_ref.dtype)


def _round_up(x, m):
    return ((x + m - 1) // m) * m


def token_mixing(x, adapt_input, params, *, tm=1024, compute_dtype=None,
                 vmem_tile_budget_bytes=48 << 20):
    """x: (B, S, D), adapt_input: (A,). Returns (B, S, D).

    compute_dtype: optional dtype (e.g. jnp.bfloat16) for the matmul operands.
                   Accumulation and the bias add stay f32.
    """
    B, S, D = x.shape
    N = B * S
    Dp = _round_up(D, 128)                       # lane-dense out-feature dim

    # ---- W_eff built once in plain JAX (cheap; removed from the kernel) ----
    adapt_w = (params["adapt_weight"] @ adapt_input + params["adapt_bias"]).reshape(D, D)
    w_eff = params["weight"] + adapt_w           # (out, in)  -- F.linear weight
    w_eff_t = w_eff.T                            # (in=D, out=D), pre-transposed feed
    b = params["bias"]
    if Dp != D:
        w_eff_t = jnp.pad(w_eff_t, ((0, 0), (0, Dp - D)))
        b = jnp.pad(b, ((0, Dp - D),))
    b2 = b.reshape(1, Dp).astype(jnp.float32)    # bias add stays f32 (v5e: no bf16 VPU)

    xf = x.reshape(N, D)
    if compute_dtype is not None:
        xf = xf.astype(compute_dtype)
        w_eff_t = w_eff_t.astype(compute_dtype)

    # ---- Row tile sizing against a VMEM budget (re-derive per generation) ----
    x_bytes = xf.dtype.itemsize
    w_bytes = w_eff_t.dtype.itemsize
    o_bytes = jnp.dtype(x.dtype).itemsize
    resident = 2 * (D * Dp * w_bytes + Dp * 4)               # weight + bias (2 bufs each)
    per_row = 2 * (D * x_bytes + Dp * o_bytes)               # double-buffered x + out tiles
    tm_max = max(8, int((vmem_tile_budget_bytes - resident) // per_row))
    tm = max(8, (min(tm, tm_max) // 8) * 8)                  # sublane-aligned
    if tm >= N:
        tm = N                                               # full-extent block: no divisibility req.
        grid0 = 1
    else:
        grid0 = pl.cdiv(N, tm)                               # ragged last tile handled by Pallas

    vmem_limit = int(min(max(resident + tm * per_row + (4 << 20), 32 << 20), 60 << 20))

    out = pl.pallas_call(
        token_mixing_kernel,
        out_shape=jax.ShapeDtypeStruct((N, Dp), x.dtype),
        grid=(grid0,),
        in_specs=[
            pl.BlockSpec((tm, D), lambda i: (i, 0)),     # x tile (streamed)
            pl.BlockSpec((D, Dp), lambda i: (0, 0)),     # W_eff_T (constant index -> DMA'd once)
            pl.BlockSpec((1, Dp), lambda i: (0, 0)),     # bias
        ],
        out_specs=pl.BlockSpec((tm, Dp), lambda i: (i, 0)),
        compiler_params=pltpu.CompilerParams(
            # Grid steps are independent -> let v7x megacore split the row grid.
            dimension_semantics=("parallel",),
            vmem_limit_bytes=vmem_limit,
        ),
    )(xf, w_eff_t, b2)

    if Dp != D:
        out = out[:, :D]
    return out.reshape(B, S, D)


if __name__ == "__main__":
    B, S, D, A = 2, 8, 32, 8   # batch, seq, token_dim, adapt_dim
    key = jax.random.PRNGKey(0)
    k = jax.random.split(key, 6)

    x = jax.random.normal(k[0], (B, S, D), jnp.float32)
    adapt_input = jax.random.normal(k[1], (A,), jnp.float32)
    params = {
        "weight":       jax.random.normal(k[2], (D, D), jnp.float32),      # AdaptiveLinear.weight
        "bias":         jax.random.normal(k[3], (D,), jnp.float32),        # AdaptiveLinear.bias
        "adapt_weight": jax.random.normal(k[4], (D * D, A), jnp.float32),  # adapt nn.Linear weight
        "adapt_bias":   jax.random.normal(k[5], (D * D,), jnp.float32),    # adapt nn.Linear bias
    }

    # pure-JAX reference of the PyTorch forward
    adapt_w = (params["adapt_weight"] @ adapt_input + params["adapt_bias"]).reshape(D, D)
    w_eff = params["weight"] + adapt_w
    ref = (x.reshape(B * S, D) @ w_eff.T + params["bias"]).reshape(B, S, D)

    # f32 path (default)
    out = jax.block_until_ready(token_mixing(x, adapt_input, params))
    assert out.shape == (B, S, D) and out.dtype == jnp.float32
    assert jnp.allclose(out, ref, atol=1e-4, rtol=1e-4), float(jnp.max(jnp.abs(out - ref)))

    # bf16 MXU-feed path (f32 accumulation), loose tolerance for input rounding.
    out_bf16 = jax.block_until_ready(
        token_mixing(x, adapt_input, params, compute_dtype=jnp.bfloat16))
    assert out_bf16.shape == (B, S, D) and out_bf16.dtype == jnp.float32
    assert float(jnp.max(jnp.abs(out_bf16 - ref))) < 1.0

    print("KERNEL_OK")
</pallas_src>

<mosaic_0001>
module attributes {stable_mosaic.version = 11 : i64} {
  func.func @token_mixing_kernel(%arg0: i32, %arg1: memref<16x32xf32, #tpu.memory_space<vmem>>, %arg2: memref<32x128xf32, #tpu.memory_space<vmem>>, %arg3: memref<1x128xf32, #tpu.memory_space<vmem>>, %arg4: memref<16x128xf32, #tpu.memory_space<vmem>>) attributes {dimension_semantics = [#tpu.dimension_semantics<parallel>], iteration_bounds = array<i64: 1>, scalar_prefetch = 0 : i64, scratch_operands = 0 : i64, tpu.core_type = #tpu.core_type<tc>, window_params = [{transform_indices = @transform_0, window_bounds = array<i64: 16, 32>}, {pipeline_mode = #tpu.pipeline_mode<synchronous>, transform_indices = @transform_1, window_bounds = array<i64: 32, 128>}, {pipeline_mode = #tpu.pipeline_mode<synchronous>, transform_indices = @transform_2, window_bounds = array<i64: 1, 128>}, {transform_indices = @transform_3, window_bounds = array<i64: 16, 128>}]} {
    %c0 = arith.constant 0 : index
    %c0_0 = arith.constant 0 : index
    %0 = vector.load %arg1[%c0, %c0_0] : memref<16x32xf32, #tpu.memory_space<vmem>>, vector<16x32xf32>
    %c0_1 = arith.constant 0 : index
    %c0_2 = arith.constant 0 : index
    %1 = vector.load %arg2[%c0_1, %c0_2] : memref<32x128xf32, #tpu.memory_space<vmem>>, vector<32x128xf32>
    %cst = arith.constant dense<0.000000e+00> : vector<16x128xf32>
    %2 = tpu.matmul %0, %1, %cst {dimension_numbers = #tpu.dot_dimension_numbers<[1], [0], [0], [1], [0, 0, 1, 1], [], []>} : vector<16x32xf32>, vector<32x128xf32>, vector<16x128xf32> -> vector<16x128xf32>
    %c0_3 = arith.constant 0 : index
    %c0_4 = arith.constant 0 : index
    %3 = vector.load %arg3[%c0_3, %c0_4] : memref<1x128xf32, #tpu.memory_space<vmem>>, vector<1x128xf32>
    %4 = vector.broadcast %3 : vector<1x128xf32> to vector<16x128xf32>
    %5 = arith.addf %2, %4 : vector<16x128xf32>
    %c0_5 = arith.constant 0 : index
    %c0_6 = arith.constant 0 : index
    %6 = vector.load %arg4[%c0_5, %c0_6] : memref<16x128xf32, #tpu.memory_space<vmem>>, vector<16x128xf32>
    tpu.vector_store %arg4[%c0_5, %c0_6], %5 {strides = array<i32>} : memref<16x128xf32, #tpu.memory_space<vmem>>, vector<16x128xf32>,
    return
  }
  func.func @transform_0(%arg0: i32) -> (i32, i32) {
    %c0_i32 = arith.constant 0 : i32
    %c0_i32_0 = arith.constant 0 : i32
    return %arg0, %c0_i32 : i32, i32
  }
  func.func @transform_1(%arg0: i32) -> (i32, i32) {
    %c0_i32 = arith.constant 0 : i32
    %c0_i32_0 = arith.constant 0 : i32
    %c0_i32_1 = arith.constant 0 : i32
    return %c0_i32, %c0_i32_0 : i32, i32
  }
  func.func @transform_2(%arg0: i32) -> (i32, i32) {
    %c0_i32 = arith.constant 0 : i32
    %c0_i32_0 = arith.constant 0 : i32
    %c0_i32_1 = arith.constant 0 : i32
    return %c0_i32, %c0_i32_0 : i32, i32
  }
  func.func @transform_3(%arg0: i32) -> (i32, i32) {
    %c0_i32 = arith.constant 0 : i32
    %c0_i32_0 = arith.constant 0 : i32
    return %arg0, %c0_i32 : i32, i32
  }
}

</mosaic_0001>

<llo_original>
// kernel: tpu_custom_call.1
$region0: #{tpu_custom_call.1}
  #allocation0 [shape = 'u32[]', space=smem, size = 0x4, offset = 0x4, fixed_abs, tag = 'smem constant byte address 0x4 - core index']
  #allocation1 [shape = 'u32[72,128]{1,0:T(1,128)}', space=vmem, size = 0x9000, scoped, tag = 'internal scratch']
  %s0 = inlined_call_operand.hbm [shape: f32[16,32], index: 0, kind: input, shape index: {}]
  %s1 = inlined_call_operand.hbm [shape: f32[32,128], index: 1, kind: input, shape index: {}]
  %s2 = inlined_call_operand.vmem [shape: f32[1,128], index: 2, kind: input, shape index: {}]
  %s3 = inlined_call_operand.hbm [shape: f32[16,128], index: 3, kind: output, shape index: {}]
  %s4 = sld [smem:[#allocation0]]
  $region30: #{tpu_custom_call.1} parent=0
    _
  %s6 = ssub.s32 1, %s4
  %s7 = scalar_select 0, %s6, %s4
  $region1: #{tpu_custom_call.1} parent=0
    #allocation2 [shape = 'u8[8192]{0}', space=vmem, size = 0x2000, scoped, tag = 'input window, operand 0, single buffered']
    #allocation3 [shape = 's32[1]{0}', space=sflag, size = 0x4, scoped, tag = 'scoped memory for tpu_custom_call.1']
    #allocation4 [shape = 's32[1]{0}', space=sflag, size = 0x4, scoped, tag = 'scoped memory for tpu_custom_call.1']
    #allocation5 [shape = 'u8[16384]{0}', space=vmem, size = 0x4000, scoped, tag = 'input window, operand 1, single buffered']
    #allocation6 [shape = 's32[1]{0}', space=sflag, size = 0x4, scoped, tag = 'scoped memory for tpu_custom_call.1']
    #allocation7 [shape = 'u8[8192]{0}', space=vmem, size = 0x2000, scoped, tag = 'output window, operand 0, single buffered']
    %8 = vsyncpa [#allocation3], 0
    %9 = vsyncpa [#allocation6], 0
    %10 = vsyncpa [#allocation4], 0
    // Predicated region
    $region2: #{tpu_custom_call.1} parent=1 // pred_check
      _
    $region3: #{tpu_custom_call.1} parent=1 // pred_check_branch
      %12 = sbr.rel (0) target = $region5
    $region4: #{tpu_custom_call.1} parent=1 // pred_region
      %14 = vsyncadd [#allocation3], 0
      %s15 = sshll.u32 %s0, 4
      %s16 = int_to_ptr.hbm [resolvable:$true] %s15
      %s17 = sshll.u32 [#allocation2], 4
      %s18 = int_to_ptr.vmem [resolvable:$true] %s17
      %23 = dma.hbm_to_vmem [thread:$0]  %s16, 256, %s18, [#allocation3], 128, 128, 8
    $region5: #{tpu_custom_call.1} parent=1 // pred_fallthru
      _
    // Predicated region
    $region6: #{tpu_custom_call.1} parent=1 // pred_check
      _
    $region7: #{tpu_custom_call.1} parent=1 // pred_check_branch
      %25 = sbr.rel (0) target = $region9
    $region8: #{tpu_custom_call.1} parent=1 // pred_region
      %27 = vsyncadd [#allocation6], 0
      %s28 = sshll.u32 %s1, 4
      %s29 = int_to_ptr.hbm [resolvable:$true] %s28
      %s30 = sshll.u32 [#allocation5], 4
      %s31 = int_to_ptr.vmem [resolvable:$true] %s30
      %36 = dma.hbm_to_vmem [thread:$0]  %s29, 512, %s31, [#allocation6], 128, 128, 8
    $region9: #{tpu_custom_call.1} parent=1 // pred_fallthru
      _
    // Predicated region
    $region10: #{tpu_custom_call.1} parent=1 // pred_check
      _
    $region11: #{tpu_custom_call.1} parent=1 // pred_check_branch
      %38 = sbr.rel (0) target = $region13
    $region12: #{tpu_custom_call.1} parent=1 // pred_region
      _
    $region13: #{tpu_custom_call.1} parent=1 // pred_fallthru
      _
    // Predicated region
    $region14: #{tpu_custom_call.1} parent=1 // pred_check
      _
    $region15: #{tpu_custom_call.1} parent=1 // pred_check_branch
      %40 = sbr.rel (0) target = $region17
    $region16: #{tpu_custom_call.1} parent=1 // pred_region
      %42 = dma.done [#allocation3], 256
    $region17: #{tpu_custom_call.1} parent=1 // pred_fallthru
      _
    // Predicated region
    $region18: #{tpu_custom_call.1} parent=1 // pred_check
      _
    $region19: #{tpu_custom_call.1} parent=1 // pred_check_branch
      %44 = sbr.rel (0) target = $region21
    $region20: #{tpu_custom_call.1} parent=1 // pred_region
      %46 = dma.done [#allocation6], 512
    $region21: #{tpu_custom_call.1} parent=1 // pred_fallthru
      _
    %v47 = vld [vmem:[#allocation2] sm:$0xff]
    %v48 = vld [vmem:[#allocation2 + $0x8] sm:$0xff]
    %v49 = vld [vmem:[#allocation5] sm:$0xff]
    %v50 = vld [vmem:[#allocation5 + $0x8] sm:$0xff]
    %v51 = vld [vmem:[#allocation5 + $0x10] sm:$0xff]
    %v52 = vld [vmem:[#allocation5 + $0x18] sm:$0xff]
    %v53 = vld [vmem:[%s2] sm:$0x1]
    %v55 = vperm.slane %v53, 0
    %vm57 = vcmask 261120
    %v59 = vsel %vm57, %v47, 0
    %v62 = vsel %vm57, %v48, 0
    %64 = vmatpush.msra.mxu0 0.0
    %65 = vmatpush.msra.mxu0 0.0
    %66 = vmatpush.msra.mxu0 0.0
    %67 = vmatpush.msra.mxu0 0.0
    %68 = vmatpush.msra.mxu0 0.0
    %69 = vmatpush.msra.mxu0 0.0
    %70 = vmatpush.msra.mxu0 0.0
    %71 = vmatpush.msra.mxu0 0.0
    %72 = vmatpush.msra.mxu0 0.0
    %73 = vmatpush.msra.mxu0 0.0
    %74 = vmatpush.msra.mxu0 0.0
    %75 = vmatpush.msra.mxu0 0.0
    %76 = vmatpush.msra.mxu0 %v52
    %77 = vmatpush.msra.mxu0 %v51
    %78 = vmatpush.msra.mxu0 %v50
    %79 = vmatpush.msra.mxu0 %v49
    %80 = vmatmul.f32.gmra.mxu0 %v59
    %v81 = vpop.f32.mrf.mxu0
    %v82 = vadd.f32 %v55, %v81
    %83 = vmatmul.f32.gmra.mxu0 %v62
    %v84 = vpop.f32.mrf.mxu0
    %v85 = vadd.f32 %v55, %v84
    %86 = vdwg.mxu0
    %87 = vst [vmem:[#allocation7] sm:$0xff] %v82
    %88 = vst [vmem:[#allocation7 + $0x8] sm:$0xff] %v85
    // Predicated region
    $region22: #{tpu_custom_call.1} parent=1 // pred_check
      _
    $region23: #{tpu_custom_call.1} parent=1 // pred_check_branch
      %90 = sbr.rel (0) target = $region25
    $region24: #{tpu_custom_call.1} parent=1 // pred_region
      %92 = vsyncadd [#allocation4], 0
      %s93 = sshll.u32 [#allocation7], 4
      %s94 = int_to_ptr.vmem [resolvable:$true] %s93
      %s95 = sshll.u32 %s3, 4
      %s96 = int_to_ptr.hbm [resolvable:$true] %s95
      %101 = dma.vmem_to_hbm [thread:$0]  %s94, 256, %s96, [#allocation4], 128, 128, 8
    $region25: #{tpu_custom_call.1} parent=1 // pred_fallthru
      _
    // Predicated region
    $region26: #{tpu_custom_call.1} parent=1 // pred_check
      _
    $region27: #{tpu_custom_call.1} parent=1 // pred_check_branch
      %103 = sbr.rel (0) target = $region29
    $region28: #{tpu_custom_call.1} parent=1 // pred_region
      %105 = dma.done [#allocation4], 256
    $region29: #{tpu_custom_call.1} parent=1 // pred_fallthru
      _
    %106 = vsyncpa [#allocation3], 1
    %107 = vsyncpa [#allocation6], 1
    %108 = vsyncpa [#allocation4], 1

</llo_original>
